<compile_context>
chip_gen: v7x
topology: tpu7x:2x2x1
jax: 0.10.0
libtpu: 0.0.40
codegen_flags: <defaults>
</compile_context>

<pallas_src>
import jax
import jax.numpy as jnp
from jax import lax
from jax.experimental import pallas as pl
from jax.experimental.pallas import tpu as pltpu


# ----------------------------------------------------------------------------
# Pallas kernel: fused  x(B,K) . W1(N,K)^T + b1 -> ReLU
# ----------------------------------------------------------------------------
def _toy_tiny_kernel(x_ref, w_ref, b_ref, o_ref):
    # x_ref: (B, K), w_ref: (N, K)  [nn.Linear native layout], b_ref: (1, N),
    # o_ref: (B, N).  Contract the lane-dense K axis of both operands.
    acc = lax.dot_general(
        x_ref[...], w_ref[...],
        dimension_numbers=(((1,), (1,)), ((), ())),
        preferred_element_type=jnp.float32,
    )
    acc = acc + b_ref[...]
    o_ref[...] = jnp.maximum(acc, 0.0).astype(o_ref.dtype)


def toy_tiny_forward(x, params):
    """x: (B, C, H, W) float32; params["w1"]: (2, in_planes), params["b1"]: (2,)."""
    B = x.shape[0]
    xf = x.reshape(B, -1)                      # x.view(B, -1): contiguous, free
    w1, b1 = params["w1"], params["b1"]        # (N, K) nn.Linear-native, (N,)
    N, K = w1.shape
    assert xf.shape[1] == K, (xf.shape, w1.shape)

    cost = pl.CostEstimate(
        flops=2 * B * K * N,
        bytes_accessed=(B * K + N * K + N + B * N) * 4,
        transcendentals=0,
    )

    return pl.pallas_call(
        _toy_tiny_kernel,
        out_shape=jax.ShapeDtypeStruct((B, N), x.dtype),
        # Whole-array VMEM blocks, single invocation (no grid): the full
        # problem fits in VMEM with huge margin on v5e/v6e/v7x, and any grid
        # step overhead would dwarf the ~6 KFLOP of compute.
        in_specs=[
            pl.BlockSpec(memory_space=pltpu.MemorySpace.VMEM),   # x  (B, K)
            pl.BlockSpec(memory_space=pltpu.MemorySpace.VMEM),   # w1 (N, K) lane-dense
            pl.BlockSpec(memory_space=pltpu.MemorySpace.VMEM),   # b1 (1, N)
        ],
        out_specs=pl.BlockSpec(memory_space=pltpu.MemorySpace.VMEM),
        cost_estimate=cost,
    )(xf, w1, b1.reshape(1, N))


# ----------------------------------------------------------------------------
# Parameter init (mirrors nn.Linear's default uniform init, native layout)
# ----------------------------------------------------------------------------
def init_params(key, image_size=(3, 16, 16), num_classes=1):
    c, h, w = image_size
    in_planes = c * h * w
    k1, k2, k3, k4 = jax.random.split(key, 4)

    def u(k, shape, fan_in):
        bound = float(fan_in) ** -0.5
        return jax.random.uniform(k, shape, jnp.float32, -bound, bound)

    # l1: Linear(in_planes, 2) -> weight stored nn.Linear-native: (2, in_planes).
    # l2: Linear(2, num_classes) exists in __init__ but is unused in forward().
    return {
        "w1": u(k1, (2, in_planes), in_planes),
        "b1": u(k2, (2,), in_planes),
        "w2_unused": u(k3, (num_classes, 2), 2),
        "b2_unused": u(k4, (num_classes,), 2),
    }


# ----------------------------------------------------------------------------
# Pure-JAX reference (for correctness check)
# ----------------------------------------------------------------------------
def reference_forward(x, params):
    xf = x.reshape(x.shape[0], -1)
    return jax.nn.relu(xf @ params["w1"].T + params["b1"])


if __name__ == "__main__":
    image_size = (3, 16, 16)          # -> in_planes = 768
    batch = 2
    kx, kp = jax.random.split(jax.random.PRNGKey(0))
    x = jax.random.normal(kx, (batch,) + image_size, jnp.float32)
    params = init_params(kp, image_size=image_size, num_classes=1)

    out = jax.jit(toy_tiny_forward)(x, params)
    out = jax.block_until_ready(out)

    ref = reference_forward(x, params)
    assert out.shape == (batch, 2), out.shape
    assert jnp.allclose(out, ref, atol=1e-5, rtol=1e-5), \
        float(jnp.max(jnp.abs(out - ref)))
    print("KERNEL_OK")
</pallas_src>

<mosaic_0001>
module attributes {stable_mosaic.version = 11 : i64} {
  func.func @_toy_tiny_kernel(%arg0: memref<2x768xf32, #tpu.memory_space<vmem>>, %arg1: memref<2x768xf32, #tpu.memory_space<vmem>>, %arg2: memref<1x2xf32, #tpu.memory_space<vmem>>, %arg3: memref<2x2xf32, #tpu.memory_space<vmem>>) attributes {dimension_semantics = [], scalar_prefetch = 0 : i64, scratch_operands = 0 : i64, tpu.core_type = #tpu.core_type<tc>} {
    %c0 = arith.constant 0 : index
    %c0_0 = arith.constant 0 : index
    %0 = vector.load %arg0[%c0, %c0_0] : memref<2x768xf32, #tpu.memory_space<vmem>>, vector<2x768xf32>
    %c0_1 = arith.constant 0 : index
    %c0_2 = arith.constant 0 : index
    %1 = vector.load %arg1[%c0_1, %c0_2] : memref<2x768xf32, #tpu.memory_space<vmem>>, vector<2x768xf32>
    %cst = arith.constant dense<0.000000e+00> : vector<2x2xf32>
    %2 = tpu.matmul %0, %1, %cst {dimension_numbers = #tpu.dot_dimension_numbers<[1], [1], [0], [0], [0, 0, 1, 0], [], []>} : vector<2x768xf32>, vector<2x768xf32>, vector<2x2xf32> -> vector<2x2xf32>
    %c0_3 = arith.constant 0 : index
    %c0_4 = arith.constant 0 : index
    %3 = vector.load %arg2[%c0_3, %c0_4] : memref<1x2xf32, #tpu.memory_space<vmem>>, vector<1x2xf32>
    %4 = vector.broadcast %3 : vector<1x2xf32> to vector<2x2xf32>
    %5 = arith.addf %2, %4 : vector<2x2xf32>
    %cst_5 = arith.constant 0.000000e+00 : f32
    %6 = vector.broadcast %cst_5 : f32 to vector<2x2xf32>
    %7 = arith.maximumf %5, %6 : vector<2x2xf32>
    %c0_6 = arith.constant 0 : index
    %c0_7 = arith.constant 0 : index
    %8 = vector.load %arg3[%c0_6, %c0_7] : memref<2x2xf32, #tpu.memory_space<vmem>>, vector<2x2xf32>
    tpu.vector_store %arg3[%c0_6, %c0_7], %7 {strides = array<i32>} : memref<2x2xf32, #tpu.memory_space<vmem>>, vector<2x2xf32>,
    return
  }
}

</mosaic_0001>

<llo_original>
// kernel: toy_tiny_forward.1
$region0: #{toy_tiny_forward.1}
  #allocation0 [shape = 'u32[]', space=smem, size = 0x4, offset = 0x4, fixed_abs, tag = 'smem constant byte address 0x4 - core index']
  #allocation1 [shape = 'u32[144,128]{1,0:T(1,128)}', space=vmem, size = 0x12000, scoped, tag = 'internal scratch']
  %s0 = inlined_call_operand.vmem [shape: f32[2,768], index: 0, kind: input, shape index: {}]
  %s1 = inlined_call_operand.vmem [shape: f32[2,768], index: 1, kind: input, shape index: {}]
  %s2 = inlined_call_operand.vmem [shape: f32[1,2], index: 2, kind: input, shape index: {}]
  %s3 = inlined_call_operand.hbm [shape: f32[2,2], index: 3, kind: output, shape index: {}]
  %s4 = sld [smem:[#allocation0]]
  $region22: #{toy_tiny_forward.1} parent=0
    _
  %s6 = ssub.s32 1, %s4
  %s7 = scalar_select 0, %s6, %s4
  $region1: #{toy_tiny_forward.1} parent=0
    #allocation2 [shape = 'u8[1024]{0}', space=vmem, size = 0x400, scoped, tag = 'output window, operand 0, single buffered']
    #allocation3 [shape = 's32[1]{0}', space=sflag, size = 0x4, scoped, tag = 'scoped memory for toy_tiny_forward.1']
    %8 = vsyncpa [#allocation3], 0
    // Predicated region
    $region2: #{toy_tiny_forward.1} parent=1 // pred_check
      _
    $region3: #{toy_tiny_forward.1} parent=1 // pred_check_branch
      %10 = sbr.rel (0) target = $region5
    $region4: #{toy_tiny_forward.1} parent=1 // pred_region
      _
    $region5: #{toy_tiny_forward.1} parent=1 // pred_fallthru
      _
    // Predicated region
    $region6: #{toy_tiny_forward.1} parent=1 // pred_check
      _
    $region7: #{toy_tiny_forward.1} parent=1 // pred_check_branch
      %12 = sbr.rel (0) target = $region9
    $region8: #{toy_tiny_forward.1} parent=1 // pred_region
      _
    $region9: #{toy_tiny_forward.1} parent=1 // pred_fallthru
      _
    // Predicated region
    $region10: #{toy_tiny_forward.1} parent=1 // pred_check
      _
    $region11: #{toy_tiny_forward.1} parent=1 // pred_check_branch
      %14 = sbr.rel (0) target = $region13
    $region12: #{toy_tiny_forward.1} parent=1 // pred_region
      _
    $region13: #{toy_tiny_forward.1} parent=1 // pred_fallthru
      _
    %v15 = vld [vmem:[%s0] sm:$0xff]
    %v16 = vld [vmem:[%s0 + $0x8] sm:$0xf]
    %v17 = vld [vmem:[%s1] sm:$0xff]
    %v18 = vld [vmem:[%s1 + $0x8] sm:$0xf]
    %v19 = vld [vmem:[%s2] sm:$0x1]
    %v21 = vlaneseq
    %v22 = vshrl.u32 %v21, 7
    %v23 = vsub.s32 0, %v22
    %v24 = vrot.slane %v19, %v23
    %v28 = vcombine.high %v15, %v15
    %v30 = vunpack.c.l.s4 1983009808
    %v31 = vunpack.c.0.s8 %v30
    %v32 = vlaneseq
    %v33 = vshrl.u32 %v32, 7
    %v34 = vsub.s32 %v31, %v33
    %v35 = vrot.slane %v15, %v34
    %v37 = vunpack.c.l.s4 1983009808
    %v38 = vunpack.c.0.s8 %v37
    %v39 = vlaneseq
    %v40 = vshrl.u32 %v39, 7
    %v41 = vsub.s32 %v38, %v40
    %v42 = vrot.slane %v28, %v41
    %v43 = vcombine.high %v35, %v35
    %v44 = vcombine.high %v42, %v42
    %v46 = vunpack.c.l.s4 1983009808
    %v47 = vunpack.c.0.s8 %v46
    %v48 = vlaneseq
    %v49 = vshrl.u32 %v48, 7
    %v50 = vsub.s32 %v47, %v49
    %v51 = vrot.slane %v16, %v50
    %v52 = vcombine.high %v51, %v51
    %v61 = vcombine.high %v17, %v17
    %v63 = vunpack.c.l.s4 1983009808
    %v64 = vunpack.c.0.s8 %v63
    %v65 = vlaneseq
    %v66 = vshrl.u32 %v65, 7
    %v67 = vsub.s32 %v64, %v66
    %v68 = vrot.slane %v17, %v67
    %v70 = vunpack.c.l.s4 1983009808
    %v71 = vunpack.c.0.s8 %v70
    %v72 = vlaneseq
    %v73 = vshrl.u32 %v72, 7
    %v74 = vsub.s32 %v71, %v73
    %v75 = vrot.slane %v61, %v74
    %v76 = vcombine.high %v68, %v68
    %v77 = vcombine.high %v75, %v75
    %v79 = vunpack.c.l.s4 1983009808
    %v80 = vunpack.c.0.s8 %v79
    %v81 = vlaneseq
    %v82 = vshrl.u32 %v81, 7
    %v83 = vsub.s32 %v80, %v82
    %v84 = vrot.slane %v18, %v83
    %v85 = vcombine.high %v84, %v84
    %92 = vmatprep.subr.mxu0 %v76
    %93 = vmatpush1.xpose.msra.mxu0 %v68
    %94 = vmatprep.subr.mxu0 0.0
    %95 = vmatpush1.xpose.msra.mxu0 0.0
    %96 = vmatprep.subr.mxu0 0.0
    %97 = vmatpush1.xpose.msra.mxu0 0.0
    %98 = vmatprep.subr.mxu0 0.0
    %99 = vmatpush1.xpose.msra.mxu0 0.0
    %100 = vmatprep.subr.mxu0 0.0
    %101 = vmatpush1.xpose.msra.mxu0 0.0
    %102 = vmatprep.subr.mxu0 0.0
    %103 = vmatpush1.xpose.msra.mxu0 0.0
    %104 = vmatprep.subr.mxu0 0.0
    %105 = vmatpush1.xpose.msra.mxu0 0.0
    %106 = vmatprep.subr.mxu0 0.0
    %107 = vmatpush1.xpose.msra.mxu0 0.0
    %108 = vmatprep.subr.mxu0 0.0
    %109 = vmatpush1.xpose.msra.mxu0 0.0
    %110 = vmatprep.subr.mxu0 0.0
    %111 = vmatpush1.xpose.msra.mxu0 0.0
    %112 = vmatprep.subr.mxu0 0.0
    %113 = vmatpush1.xpose.msra.mxu0 0.0
    %114 = vmatprep.subr.mxu0 0.0
    %115 = vmatpush1.xpose.msra.mxu0 0.0
    %116 = vmatprep.subr.mxu0 0.0
    %117 = vmatpush1.xpose.msra.mxu0 0.0
    %118 = vmatprep.subr.mxu0 0.0
    %119 = vmatpush1.xpose.msra.mxu0 0.0
    %120 = vmatprep.subr.mxu0 0.0
    %121 = vmatpush1.xpose.msra.mxu0 0.0
    %122 = vmatprep.subr.mxu0 0.0
    %123 = vmatpush1.xpose.msra.mxu0 0.0
    %124 = vmatprep.subr.mxu0 0.0
    %125 = vmatpush1.xpose.msra.mxu0 0.0
    %126 = vmatprep.subr.mxu0 0.0
    %127 = vmatpush1.xpose.msra.mxu0 0.0
    %128 = vmatprep.subr.mxu0 0.0
    %129 = vmatpush1.xpose.msra.mxu0 0.0
    %130 = vmatprep.subr.mxu0 0.0
    %131 = vmatpush1.xpose.msra.mxu0 0.0
    %132 = vmatprep.subr.mxu0 0.0
    %133 = vmatpush1.xpose.msra.mxu0 0.0
    %134 = vmatprep.subr.mxu0 0.0
    %135 = vmatpush1.xpose.msra.mxu0 0.0
    %136 = vmatprep.subr.mxu0 0.0
    %137 = vmatpush1.xpose.msra.mxu0 0.0
    %138 = vmatprep.subr.mxu0 0.0
    %139 = vmatpush1.xpose.msra.mxu0 0.0
    %140 = vmatprep.subr.mxu0 0.0
    %141 = vmatpush1.xpose.msra.mxu0 0.0
    %142 = vmatprep.subr.mxu0 0.0
    %143 = vmatpush1.xpose.msra.mxu0 0.0
    %144 = vmatprep.subr.mxu0 0.0
    %145 = vmatpush1.xpose.msra.mxu0 0.0
    %146 = vmatprep.subr.mxu0 0.0
    %147 = vmatpush1.xpose.msra.mxu0 0.0
    %148 = vmatprep.subr.mxu0 0.0
    %149 = vmatpush1.xpose.msra.mxu0 0.0
    %150 = vmatprep.subr.mxu0 0.0
    %151 = vmatpush1.xpose.msra.mxu0 0.0
    %152 = vmatprep.subr.mxu0 0.0
    %153 = vmatpush1.xpose.msra.mxu0 0.0
    %154 = vmatprep.subr.mxu0 0.0
    %155 = vmatpush1.xpose.msra.mxu0 0.0
    %156 = vmatprep.mubr.f32.mxu0 %v43
    %157 = vmatmul.mubr.f32.gmra.mrb[0].mxu0 %v35
    %v158 = vpop.f32.mrb[0].mxu0
    %v159 = vadd.f32 %v24, %v158
    %v160 = vpop.f32.mrb[0].mxu0
    %161 = vdwg.mxu0
    %162 = vmatprep.subr.mxu0 %v77
    %163 = vmatpush1.xpose.msra.mxu0 %v75
    %164 = vmatprep.subr.mxu0 0.0
    %165 = vmatpush1.xpose.msra.mxu0 0.0
    %166 = vmatprep.subr.mxu0 0.0
    %167 = vmatpush1.xpose.msra.mxu0 0.0
    %168 = vmatprep.subr.mxu0 0.0
    %169 = vmatpush1.xpose.msra.mxu0 0.0
    %170 = vmatprep.subr.mxu0 0.0
    %171 = vmatpush1.xpose.msra.mxu0 0.0
    %172 = vmatprep.subr.mxu0 0.0
    %173 = vmatpush1.xpose.msra.mxu0 0.0
    %174 = vmatprep.subr.mxu0 0.0
    %175 = vmatpush1.xpose.msra.mxu0 0.0
    %176 = vmatprep.subr.mxu0 0.0
    %177 = vmatpush1.xpose.msra.mxu0 0.0
    %178 = vmatprep.subr.mxu0 0.0
    %179 = vmatpush1.xpose.msra.mxu0 0.0
    %180 = vmatprep.subr.mxu0 0.0
    %181 = vmatpush1.xpose.msra.mxu0 0.0
    %182 = vmatprep.subr.mxu0 0.0
    %183 = vmatpush1.xpose.msra.mxu0 0.0
    %184 = vmatprep.subr.mxu0 0.0
    %185 = vmatpush1.xpose.msra.mxu0 0.0
    %186 = vmatprep.subr.mxu0 0.0
    %187 = vmatpush1.xpose.msra.mxu0 0.0
    %188 = vmatprep.subr.mxu0 0.0
    %189 = vmatpush1.xpose.msra.mxu0 0.0
    %190 = vmatprep.subr.mxu0 0.0
    %191 = vmatpush1.xpose.msra.mxu0 0.0
    %192 = vmatprep.subr.mxu0 0.0
    %193 = vmatpush1.xpose.msra.mxu0 0.0
    %194 = vmatprep.subr.mxu0 0.0
    %195 = vmatpush1.xpose.msra.mxu0 0.0
    %196 = vmatprep.subr.mxu0 0.0
    %197 = vmatpush1.xpose.msra.mxu0 0.0
    %198 = vmatprep.subr.mxu0 0.0
    %199 = vmatpush1.xpose.msra.mxu0 0.0
    %200 = vmatprep.subr.mxu0 0.0
    %201 = vmatpush1.xpose.msra.mxu0 0.0
    %202 = vmatprep.subr.mxu0 0.0
    %203 = vmatpush1.xpose.msra.mxu0 0.0
    %204 = vmatprep.subr.mxu0 0.0
    %205 = vmatpush1.xpose.msra.mxu0 0.0
    %206 = vmatprep.subr.mxu0 0.0
    %207 = vmatpush1.xpose.msra.mxu0 0.0
    %208 = vmatprep.subr.mxu0 0.0
    %209 = vmatpush1.xpose.msra.mxu0 0.0
    %210 = vmatprep.subr.mxu0 0.0
    %211 = vmatpush1.xpose.msra.mxu0 0.0
    %212 = vmatprep.subr.mxu0 0.0
    %213 = vmatpush1.xpose.msra.mxu0 0.0
    %214 = vmatprep.subr.mxu0 0.0
    %215 = vmatpush1.xpose.msra.mxu0 0.0
    %216 = vmatprep.subr.mxu0 0.0
    %217 = vmatpush1.xpose.msra.mxu0 0.0
    %218 = vmatprep.subr.mxu0 0.0
    %219 = vmatpush1.xpose.msra.mxu0 0.0
    %220 = vmatprep.subr.mxu0 0.0
    %221 = vmatpush1.xpose.msra.mxu0 0.0
    %222 = vmatprep.subr.mxu0 0.0
    %223 = vmatpush1.xpose.msra.mxu0 0.0
    %224 = vmatprep.subr.mxu0 0.0
    %225 = vmatpush1.xpose.msra.mxu0 0.0
    %226 = vmatprep.mubr.f32.mxu0 %v44
    %227 = vmatmul.mubr.f32.gmra.mrb[0].mxu0 %v42
    %v228 = vpop.f32.mrb[0].mxu0
    %v229 = vadd.f32 %v159, %v228
    %v230 = vpop.f32.mrb[0].mxu0
    %231 = vdwg.mxu0
    %232 = vmatprep.subr.mxu0 %v85
    %233 = vmatpush1.xpose.msra.mxu0 %v84
    %234 = vmatprep.subr.mxu0 0.0
    %235 = vmatpush1.xpose.msra.mxu0 0.0
    %236 = vmatprep.subr.mxu0 0.0
    %237 = vmatpush1.xpose.msra.mxu0 0.0
    %238 = vmatprep.subr.mxu0 0.0
    %239 = vmatpush1.xpose.msra.mxu0 0.0
    %240 = vmatprep.subr.mxu0 0.0
    %241 = vmatpush1.xpose.msra.mxu0 0.0
    %242 = vmatprep.subr.mxu0 0.0
    %243 = vmatpush1.xpose.msra.mxu0 0.0
    %244 = vmatprep.subr.mxu0 0.0
    %245 = vmatpush1.xpose.msra.mxu0 0.0
    %246 = vmatprep.subr.mxu0 0.0
    %247 = vmatpush1.xpose.msra.mxu0 0.0
    %248 = vmatprep.subr.mxu0 0.0
    %249 = vmatpush1.xpose.msra.mxu0 0.0
    %250 = vmatprep.subr.mxu0 0.0
    %251 = vmatpush1.xpose.msra.mxu0 0.0
    %252 = vmatprep.subr.mxu0 0.0
    %253 = vmatpush1.xpose.msra.mxu0 0.0
    %254 = vmatprep.subr.mxu0 0.0
    %255 = vmatpush1.xpose.msra.mxu0 0.0
    %256 = vmatprep.subr.mxu0 0.0
    %257 = vmatpush1.xpose.msra.mxu0 0.0
    %258 = vmatprep.subr.mxu0 0.0
    %259 = vmatpush1.xpose.msra.mxu0 0.0
    %260 = vmatprep.subr.mxu0 0.0
    %261 = vmatpush1.xpose.msra.mxu0 0.0
    %262 = vmatprep.subr.mxu0 0.0
    %263 = vmatpush1.xpose.msra.mxu0 0.0
    %264 = vmatprep.subr.mxu0 0.0
    %265 = vmatpush1.xpose.msra.mxu0 0.0
    %266 = vmatprep.subr.mxu0 0.0
    %267 = vmatpush1.xpose.msra.mxu0 0.0
    %268 = vmatprep.subr.mxu0 0.0
    %269 = vmatpush1.xpose.msra.mxu0 0.0
    %270 = vmatprep.subr.mxu0 0.0
    %271 = vmatpush1.xpose.msra.mxu0 0.0
    %272 = vmatprep.subr.mxu0 0.0
    %273 = vmatpush1.xpose.msra.mxu0 0.0
    %274 = vmatprep.subr.mxu0 0.0
    %275 = vmatpush1.xpose.msra.mxu0 0.0
    %276 = vmatprep.subr.mxu0 0.0
    %277 = vmatpush1.xpose.msra.mxu0 0.0
    %278 = vmatprep.subr.mxu0 0.0
    %279 = vmatpush1.xpose.msra.mxu0 0.0
    %280 = vmatprep.subr.mxu0 0.0
    %281 = vmatpush1.xpose.msra.mxu0 0.0
    %282 = vmatprep.subr.mxu0 0.0
    %283 = vmatpush1.xpose.msra.mxu0 0.0
    %284 = vmatprep.subr.mxu0 0.0
    %285 = vmatpush1.xpose.msra.mxu0 0.0
    %286 = vmatprep.subr.mxu0 0.0
    %287 = vmatpush1.xpose.msra.mxu0 0.0
    %288 = vmatprep.subr.mxu0 0.0
    %289 = vmatpush1.xpose.msra.mxu0 0.0
    %290 = vmatprep.subr.mxu0 0.0
    %291 = vmatpush1.xpose.msra.mxu0 0.0
    %292 = vmatprep.subr.mxu0 0.0
    %293 = vmatpush1.xpose.msra.mxu0 0.0
    %294 = vmatprep.subr.mxu0 0.0
    %295 = vmatpush1.xpose.msra.mxu0 0.0
    %296 = vmatprep.mubr.f32.mxu0 %v52
    %297 = vmatmul.mubr.f32.gmra.mrb[0].mxu0 %v51
    %v298 = vpop.f32.mrb[0].mxu0
    %v299 = vadd.f32 %v229, %v298
    %v300 = vpop.f32.mrb[0].mxu0
    %301 = vdwg.mxu0
    %v302 = vmax.f32 %v299, 0.0
    %vm303 = vcmask 9216
    %304 = vst.msk [vmem:[#allocation2] sm:$0x3] %vm303, %v302
    // Predicated region
    $region14: #{toy_tiny_forward.1} parent=1 // pred_check
      _
    $region15: #{toy_tiny_forward.1} parent=1 // pred_check_branch
      %306 = sbr.rel (0) target = $region17
    $region16: #{toy_tiny_forward.1} parent=1 // pred_region
      %s308 = ssub.s32 32, 32
      %309 = vsyncadd [#allocation3], %s308
      %s311 = sshll.u32 [#allocation2], 4
      %s312 = int_to_ptr.vmem [resolvable:$true] %s311
      %314 = dma.vmem_to_hbm [thread:$0]  %s312, 32, %s3, [#allocation3]
    $region17: #{toy_tiny_forward.1} parent=1 // pred_fallthru
      _
    // Predicated region
    $region18: #{toy_tiny_forward.1} parent=1 // pred_check
      _
    $region19: #{toy_tiny_forward.1} parent=1 // pred_check_branch
      %316 = sbr.rel (0) target = $region21
    $region20: #{toy_tiny_forward.1} parent=1 // pred_region
      %317 = dma.done [#allocation3], 32
    $region21: #{toy_tiny_forward.1} parent=1 // pred_fallthru
      _
    %318 = vsyncpa [#allocation3], 1

</llo_original>
